<compile_context>
chip_gen: v7x
topology: tpu7x:2x2x1
jax: 0.10.0
libtpu: 0.0.40
codegen_flags: <defaults>
</compile_context>

<pallas_src>
import functools

import jax
import jax.numpy as jnp
from jax.experimental import pallas as pl
from jax.experimental.pallas import tpu as pltpu

_LANES = 128
_SUBLANES = 8
_NUM_CORE_SPLITS = 2  # v7x has 2 TensorCores; extra grid row is ~free on v5e/v6e.


def _pick_max_tile_rows():
    """Largest tile (in 128-lane rows) streamed per grid step."""
    # Bigger tiles amortize the ~0.35 us fixed cost per grid step.  v7x's
    # 3.2 TB/s HBM makes the per-step DMA fastest, so it gets the largest tile
    # (12 MiB of double-buffered inputs); 2048 rows (6 MiB) everywhere else.
    try:
        kind = jax.devices()[0].device_kind.lower()
    except Exception:  # pragma: no cover - defensive (interpret mode, etc.)
        kind = ""
    if "v7" in kind or "tpu7" in kind:
        return 4096
    return 2048


def _peer_selection_kernel(w_ref, g_ref, e_ref, num_ref, den_ref, sq_ref, *,
                           n, tile_rows, tiles_per_core):
    c = pl.program_id(0)  # core-split index ("parallel")
    i = pl.program_id(1)  # tile index within this core's range ("arbitrary")

    @pl.when(i == 0)
    def _init():
        num_ref[...] = jnp.zeros_like(num_ref)
        den_ref[...] = jnp.zeros_like(den_ref)
        sq_ref[...] = jnp.zeros_like(sq_ref)

    tile_elems = tile_rows * _LANES
    # Valid elements left starting at this tile's flat offset (int32 math:
    # assumes n < 2**31 elements, i.e. < 8 GiB per input).  Tiles that extend
    # past n (ragged tail, or a clamped duplicate tile when the tile count is
    # odd) take the masked path; all other tiles run the unmasked hot path.
    remaining = n - (c * tiles_per_core + i) * tile_elems
    needs_mask = remaining < tile_elems

    def accumulate(masked):
        w = w_ref[...]
        g = g_ref[...]
        e = e_ref[...]
        if masked:
            # Out-of-bounds rows of a partial block contain garbage, so w/g/e
            # must all be zeroed *before* any arithmetic touches them.
            row = jax.lax.broadcasted_iota(jnp.int32, (tile_rows, _LANES), 0)
            col = jax.lax.broadcasted_iota(jnp.int32, (tile_rows, _LANES), 1)
            valid = row * _LANES + col < remaining
            w = jnp.where(valid, w, 0.0)
            g = jnp.where(valid, g, 0.0)
            e = jnp.where(valid, e, 0.0)
        # sigmoid as a single EUP transcendental (tanh) + 2 cheap VPU ops.
        s = 0.5 * (jnp.tanh(0.5 * w) + 1.0)

        def fold(x):
            # (tile_rows, 128) -> (8, 128): vreg-vreg adds on the VALU only,
            # no cross-lane work in the hot loop.
            return jnp.sum(
                x.reshape(tile_rows // _SUBLANES, _SUBLANES, _LANES), axis=0)

        num_ref[...] += fold(s * g)   # partial of dot(sigmoid(w), gain)
        den_ref[...] += fold(s * e)   # partial of dot(sigmoid(w), energy)
        sq_ref[...] += fold(w * w)    # partial of ||w||^2

    @pl.when(jnp.logical_not(needs_mask))
    def _hot():
        accumulate(False)

    @pl.when(needs_mask)
    def _tail():
        accumulate(True)


def peer_selection_forward(weights, gain, energy, theta=0.1,
                           max_tile_rows=None):
    """weights, gain, energy: 1-D arrays of length n_samples. Returns a scalar."""
    n = weights.shape[0]
    if max_tile_rows is None:
        max_tile_rows = _pick_max_tile_rows()

    # Lane-dense 2-D view (rows, 128).  Large 128-aligned inputs reshape for
    # free; only tiny or non-lane-aligned inputs pay for a zero pad.
    rows = max(pl.cdiv(n, _LANES), _SUBLANES)
    tile_rows = min(max_tile_rows, (rows // _SUBLANES) * _SUBLANES)
    total_tiles = pl.cdiv(rows, tile_rows)
    tiles_per_core = pl.cdiv(total_tiles, _NUM_CORE_SPLITS)
    padded_len = rows * _LANES

    def prep(x):
        x = jnp.asarray(x, dtype=jnp.float32)
        if padded_len != n:
            x = jnp.pad(x, (0, padded_len - n))  # zeros: exact for all 3 sums
        return x.reshape(rows, _LANES)

    w2, g2, e2 = prep(weights), prep(gain), prep(energy)

    kernel = functools.partial(
        _peer_selection_kernel, n=int(n), tile_rows=tile_rows,
        tiles_per_core=tiles_per_core)

    def in_map(c, i):
        # Clamp so an odd tile count never indexes past the array; the clamped
        # duplicate tile is fully masked (contributes zero) inside the kernel.
        t = jnp.minimum(c * tiles_per_core + i, total_tiles - 1)
        return (t, 0)

    tile_spec = pl.BlockSpec((tile_rows, _LANES), in_map)
    part_spec = pl.BlockSpec((None, _SUBLANES, _LANES), lambda c, i: (c, 0, 0))
    part_shape = jax.ShapeDtypeStruct(
        (_NUM_CORE_SPLITS, _SUBLANES, _LANES), jnp.float32)

    num_p, den_p, sq_p = pl.pallas_call(
        kernel,
        out_shape=(part_shape, part_shape, part_shape),
        grid_spec=pltpu.PrefetchScalarGridSpec(
            num_scalar_prefetch=0,
            grid=(_NUM_CORE_SPLITS, tiles_per_core),
            in_specs=[tile_spec, tile_spec, tile_spec],
            out_specs=(part_spec, part_spec, part_spec),
        ),
        compiler_params=pltpu.CompilerParams(
            dimension_semantics=("parallel", "arbitrary"),
            # Headroom for the large-tile configurations on every generation
            # (v5e's 16 MiB scoped default is the binding one otherwise).
            vmem_limit_bytes=48 * 1024 * 1024,
        ),
        cost_estimate=pl.CostEstimate(
            flops=9 * padded_len,
            transcendentals=padded_len,
            bytes_accessed=3 * 4 * padded_len
            + 3 * 4 * _NUM_CORE_SPLITS * _SUBLANES * _LANES,
        ),
    )(w2, g2, e2)

    # Tiny epilogue in plain JAX: reduce the per-core (8, 128) partials and
    # apply the divide / sqrt / theta combine.
    num = jnp.sum(num_p)
    den = jnp.sum(den_p)
    sq = jnp.sum(sq_p)
    return num / den + theta * jnp.sqrt(sq)


if __name__ == "__main__":
    n_samples = 32
    theta = 0.1

    key = jax.random.PRNGKey(0)
    k_w, k_g, k_e = jax.random.split(key, 3)

    # nn.Parameter(torch.rand(n_samples)) -> uniform [0, 1)
    weights = jax.random.uniform(k_w, (n_samples,), dtype=jnp.float32)
    gain = jax.random.uniform(k_g, (n_samples,), dtype=jnp.float32)
    energy = jax.random.uniform(k_e, (n_samples,), dtype=jnp.float32) + 0.1

    out = peer_selection_forward(weights, gain, energy, theta=theta)
    out = jax.block_until_ready(out)

    # Pure-JAX reference check.
    s = jax.nn.sigmoid(weights)
    ref = jnp.dot(s, gain) / jnp.dot(s, energy) + theta * jnp.linalg.norm(weights)
    assert jnp.allclose(out, ref, rtol=1e-5, atol=1e-5), (out, ref)

    print("KERNEL_OK")
</pallas_src>

<mosaic_0001>
module attributes {stable_mosaic.version = 11 : i64} {
  func.func @_peer_selection_kernel(%arg0: i32, %arg1: i32, %arg2: memref<8x128xf32, #tpu.memory_space<vmem>>, %arg3: memref<8x128xf32, #tpu.memory_space<vmem>>, %arg4: memref<8x128xf32, #tpu.memory_space<vmem>>, %arg5: memref<1x8x128xf32, #tpu.memory_space<vmem>>, %arg6: memref<1x8x128xf32, #tpu.memory_space<vmem>>, %arg7: memref<1x8x128xf32, #tpu.memory_space<vmem>>) attributes {dimension_semantics = [#tpu.dimension_semantics<parallel>, #tpu.dimension_semantics<arbitrary>], iteration_bounds = array<i64: 2, 1>, scalar_prefetch = 0 : i64, scratch_operands = 0 : i64, tpu.core_type = #tpu.core_type<tc>, window_params = [{transform_indices = @transform_0, window_bounds = array<i64: 8, 128>}, {transform_indices = @transform_1, window_bounds = array<i64: 8, 128>}, {transform_indices = @transform_2, window_bounds = array<i64: 8, 128>}, {transform_indices = @transform_3, window_bounds = array<i64: 1, 8, 128>}, {transform_indices = @transform_4, window_bounds = array<i64: 1, 8, 128>}, {transform_indices = @transform_5, window_bounds = array<i64: 1, 8, 128>}]} {
    %c0_i32 = arith.constant 0 : i32
    %0 = arith.cmpi eq, %arg1, %c0_i32 : i32
    %1 = arith.extui %0 : i1 to i32
    %c0_i32_0 = arith.constant 0 : i32
    %2 = arith.cmpi ne, %1, %c0_i32_0 : i32
    scf.if %2 {
      %cst = arith.constant 0.000000e+00 : f32
      %13 = vector.broadcast %cst : f32 to vector<8x128xf32>
      %c0 = arith.constant 0 : index
      %c0_4 = arith.constant 0 : index
      %c0_5 = arith.constant 0 : index
      %14 = vector.load %arg5[%c0, %c0_4, %c0_5] : memref<1x8x128xf32, #tpu.memory_space<vmem>>, vector<1x8x128xf32>
      %15 = vector.shape_cast %14 : vector<1x8x128xf32> to vector<8x128xf32>
      %16 = vector.shape_cast %13 : vector<8x128xf32> to vector<1x8x128xf32>
      tpu.vector_store %arg5[%c0, %c0_4, %c0_5], %16 {strides = array<i32>} : memref<1x8x128xf32, #tpu.memory_space<vmem>>, vector<1x8x128xf32>,
      %cst_6 = arith.constant 0.000000e+00 : f32
      %17 = vector.broadcast %cst_6 : f32 to vector<8x128xf32>
      %c0_7 = arith.constant 0 : index
      %c0_8 = arith.constant 0 : index
      %c0_9 = arith.constant 0 : index
      %18 = vector.load %arg6[%c0_7, %c0_8, %c0_9] : memref<1x8x128xf32, #tpu.memory_space<vmem>>, vector<1x8x128xf32>
      %19 = vector.shape_cast %18 : vector<1x8x128xf32> to vector<8x128xf32>
      %20 = vector.shape_cast %17 : vector<8x128xf32> to vector<1x8x128xf32>
      tpu.vector_store %arg6[%c0_7, %c0_8, %c0_9], %20 {strides = array<i32>} : memref<1x8x128xf32, #tpu.memory_space<vmem>>, vector<1x8x128xf32>,
      %cst_10 = arith.constant 0.000000e+00 : f32
      %21 = vector.broadcast %cst_10 : f32 to vector<8x128xf32>
      %c0_11 = arith.constant 0 : index
      %c0_12 = arith.constant 0 : index
      %c0_13 = arith.constant 0 : index
      %22 = vector.load %arg7[%c0_11, %c0_12, %c0_13] : memref<1x8x128xf32, #tpu.memory_space<vmem>>, vector<1x8x128xf32>
      %23 = vector.shape_cast %22 : vector<1x8x128xf32> to vector<8x128xf32>
      %24 = vector.shape_cast %21 : vector<8x128xf32> to vector<1x8x128xf32>
      tpu.vector_store %arg7[%c0_11, %c0_12, %c0_13], %24 {strides = array<i32>} : memref<1x8x128xf32, #tpu.memory_space<vmem>>, vector<1x8x128xf32>,
    } else {
    }
    %c1_i32 = arith.constant 1 : i32
    %3 = arith.muli %arg0, %c1_i32 : i32
    %4 = arith.addi %3, %arg1 : i32
    %c1024_i32 = arith.constant 1024 : i32
    %5 = arith.muli %4, %c1024_i32 : i32
    %c32_i32 = arith.constant 32 : i32
    %6 = arith.subi %c32_i32, %5 : i32
    %c1024_i32_1 = arith.constant 1024 : i32
    %7 = arith.cmpi slt, %6, %c1024_i32_1 : i32
    %true = arith.constant true
    %8 = arith.xori %7, %true : i1
    %9 = arith.extui %8 : i1 to i32
    %c0_i32_2 = arith.constant 0 : i32
    %10 = arith.cmpi ne, %9, %c0_i32_2 : i32
    scf.if %10 {
      %c0 = arith.constant 0 : index
      %c0_4 = arith.constant 0 : index
      %13 = vector.load %arg2[%c0, %c0_4] : memref<8x128xf32, #tpu.memory_space<vmem>>, vector<8x128xf32>
      %c0_5 = arith.constant 0 : index
      %c0_6 = arith.constant 0 : index
      %14 = vector.load %arg3[%c0_5, %c0_6] : memref<8x128xf32, #tpu.memory_space<vmem>>, vector<8x128xf32>
      %c0_7 = arith.constant 0 : index
      %c0_8 = arith.constant 0 : index
      %15 = vector.load %arg4[%c0_7, %c0_8] : memref<8x128xf32, #tpu.memory_space<vmem>>, vector<8x128xf32>
      %cst = arith.constant 5.000000e-01 : f32
      %16 = vector.broadcast %cst : f32 to vector<8x128xf32>
      %17 = arith.mulf %16, %13 : vector<8x128xf32>
      %18 = math.tanh %17 : vector<8x128xf32>
      %cst_9 = arith.constant 1.000000e+00 : f32
      %19 = vector.broadcast %cst_9 : f32 to vector<8x128xf32>
      %20 = arith.addf %18, %19 : vector<8x128xf32>
      %cst_10 = arith.constant 5.000000e-01 : f32
      %21 = vector.broadcast %cst_10 : f32 to vector<8x128xf32>
      %22 = arith.mulf %21, %20 : vector<8x128xf32>
      %c0_11 = arith.constant 0 : index
      %c0_12 = arith.constant 0 : index
      %c0_13 = arith.constant 0 : index
      %23 = vector.load %arg5[%c0_11, %c0_12, %c0_13] : memref<1x8x128xf32, #tpu.memory_space<vmem>>, vector<1x8x128xf32>
      %24 = vector.shape_cast %23 : vector<1x8x128xf32> to vector<8x128xf32>
      %25 = arith.mulf %22, %14 : vector<8x128xf32>
      %26 = vector.shape_cast %25 : vector<8x128xf32> to vector<1x8x128xf32>
      %cst_14 = arith.constant dense<0.000000e+00> : vector<8x128xf32>
      %27 = vector.multi_reduction <add>, %26, %cst_14 [0] : vector<1x8x128xf32> to vector<8x128xf32>
      %28 = arith.addf %24, %27 : vector<8x128xf32>
      %c0_15 = arith.constant 0 : index
      %c0_16 = arith.constant 0 : index
      %c0_17 = arith.constant 0 : index
      %29 = vector.load %arg5[%c0_15, %c0_16, %c0_17] : memref<1x8x128xf32, #tpu.memory_space<vmem>>, vector<1x8x128xf32>
      %30 = vector.shape_cast %29 : vector<1x8x128xf32> to vector<8x128xf32>
      %31 = vector.shape_cast %28 : vector<8x128xf32> to vector<1x8x128xf32>
      tpu.vector_store %arg5[%c0_15, %c0_16, %c0_17], %31 {strides = array<i32>} : memref<1x8x128xf32, #tpu.memory_space<vmem>>, vector<1x8x128xf32>,
      %c0_18 = arith.constant 0 : index
      %c0_19 = arith.constant 0 : index
      %c0_20 = arith.constant 0 : index
      %32 = vector.load %arg6[%c0_18, %c0_19, %c0_20] : memref<1x8x128xf32, #tpu.memory_space<vmem>>, vector<1x8x128xf32>
      %33 = vector.shape_cast %32 : vector<1x8x128xf32> to vector<8x128xf32>
      %34 = arith.mulf %22, %15 : vector<8x128xf32>
      %35 = vector.shape_cast %34 : vector<8x128xf32> to vector<1x8x128xf32>
      %cst_21 = arith.constant dense<0.000000e+00> : vector<8x128xf32>
      %36 = vector.multi_reduction <add>, %35, %cst_21 [0] : vector<1x8x128xf32> to vector<8x128xf32>
      %37 = arith.addf %33, %36 : vector<8x128xf32>
      %c0_22 = arith.constant 0 : index
      %c0_23 = arith.constant 0 : index
      %c0_24 = arith.constant 0 : index
      %38 = vector.load %arg6[%c0_22, %c0_23, %c0_24] : memref<1x8x128xf32, #tpu.memory_space<vmem>>, vector<1x8x128xf32>
      %39 = vector.shape_cast %38 : vector<1x8x128xf32> to vector<8x128xf32>
      %40 = vector.shape_cast %37 : vector<8x128xf32> to vector<1x8x128xf32>
      tpu.vector_store %arg6[%c0_22, %c0_23, %c0_24], %40 {strides = array<i32>} : memref<1x8x128xf32, #tpu.memory_space<vmem>>, vector<1x8x128xf32>,
      %c0_25 = arith.constant 0 : index
      %c0_26 = arith.constant 0 : index
      %c0_27 = arith.constant 0 : index
      %41 = vector.load %arg7[%c0_25, %c0_26, %c0_27] : memref<1x8x128xf32, #tpu.memory_space<vmem>>, vector<1x8x128xf32>
      %42 = vector.shape_cast %41 : vector<1x8x128xf32> to vector<8x128xf32>
      %43 = arith.mulf %13, %13 : vector<8x128xf32>
      %44 = vector.shape_cast %43 : vector<8x128xf32> to vector<1x8x128xf32>
      %cst_28 = arith.constant dense<0.000000e+00> : vector<8x128xf32>
      %45 = vector.multi_reduction <add>, %44, %cst_28 [0] : vector<1x8x128xf32> to vector<8x128xf32>
      %46 = arith.addf %42, %45 : vector<8x128xf32>
      %c0_29 = arith.constant 0 : index
      %c0_30 = arith.constant 0 : index
      %c0_31 = arith.constant 0 : index
      %47 = vector.load %arg7[%c0_29, %c0_30, %c0_31] : memref<1x8x128xf32, #tpu.memory_space<vmem>>, vector<1x8x128xf32>
      %48 = vector.shape_cast %47 : vector<1x8x128xf32> to vector<8x128xf32>
      %49 = vector.shape_cast %46 : vector<8x128xf32> to vector<1x8x128xf32>
      tpu.vector_store %arg7[%c0_29, %c0_30, %c0_31], %49 {strides = array<i32>} : memref<1x8x128xf32, #tpu.memory_space<vmem>>, vector<1x8x128xf32>,
    } else {
    }
    %11 = arith.extui %7 : i1 to i32
    %c0_i32_3 = arith.constant 0 : i32
    %12 = arith.cmpi ne, %11, %c0_i32_3 : i32
    scf.if %12 {
      %c0 = arith.constant 0 : index
      %c0_4 = arith.constant 0 : index
      %13 = vector.load %arg2[%c0, %c0_4] : memref<8x128xf32, #tpu.memory_space<vmem>>, vector<8x128xf32>
      %c0_5 = arith.constant 0 : index
      %c0_6 = arith.constant 0 : index
      %14 = vector.load %arg3[%c0_5, %c0_6] : memref<8x128xf32, #tpu.memory_space<vmem>>, vector<8x128xf32>
      %c0_7 = arith.constant 0 : index
      %c0_8 = arith.constant 0 : index
      %15 = vector.load %arg4[%c0_7, %c0_8] : memref<8x128xf32, #tpu.memory_space<vmem>>, vector<8x128xf32>
      %16 = tpu.iota {dimensions = array<i32: 0>} : vector<8x128xi32>
      %17 = tpu.iota {dimensions = array<i32: 1>} : vector<8x128xi32>
      %c128_i32 = arith.constant 128 : i32
      %18 = vector.broadcast %c128_i32 : i32 to vector<8x128xi32>
      %19 = arith.muli %16, %18 : vector<8x128xi32>
      %20 = arith.addi %19, %17 : vector<8x128xi32>
      %21 = vector.broadcast %6 : i32 to vector<8x128xi32>
      %22 = arith.cmpi slt, %20, %21 : vector<8x128xi32>
      %cst = arith.constant 0.000000e+00 : f32
      %23 = vector.broadcast %cst : f32 to vector<8x128xf32>
      %24 = arith.select %22, %13, %23 : vector<8x128xi1>, vector<8x128xf32>
      %cst_9 = arith.constant 0.000000e+00 : f32
      %25 = vector.broadcast %cst_9 : f32 to vector<8x128xf32>
      %26 = arith.select %22, %14, %25 : vector<8x128xi1>, vector<8x128xf32>
      %cst_10 = arith.constant 0.000000e+00 : f32
      %27 = vector.broadcast %cst_10 : f32 to vector<8x128xf32>
      %28 = arith.select %22, %15, %27 : vector<8x128xi1>, vector<8x128xf32>
      %cst_11 = arith.constant 5.000000e-01 : f32
      %29 = vector.broadcast %cst_11 : f32 to vector<8x128xf32>
      %30 = arith.mulf %29, %24 : vector<8x128xf32>
      %31 = math.tanh %30 : vector<8x128xf32>
      %cst_12 = arith.constant 1.000000e+00 : f32
      %32 = vector.broadcast %cst_12 : f32 to vector<8x128xf32>
      %33 = arith.addf %31, %32 : vector<8x128xf32>
      %cst_13 = arith.constant 5.000000e-01 : f32
      %34 = vector.broadcast %cst_13 : f32 to vector<8x128xf32>
      %35 = arith.mulf %34, %33 : vector<8x128xf32>
      %c0_14 = arith.constant 0 : index
      %c0_15 = arith.constant 0 : index
      %c0_16 = arith.constant 0 : index
      %36 = vector.load %arg5[%c0_14, %c0_15, %c0_16] : memref<1x8x128xf32, #tpu.memory_space<vmem>>, vector<1x8x128xf32>
      %37 = vector.shape_cast %36 : vector<1x8x128xf32> to vector<8x128xf32>
      %38 = arith.mulf %35, %26 : vector<8x128xf32>
      %39 = vector.shape_cast %38 : vector<8x128xf32> to vector<1x8x128xf32>
      %cst_17 = arith.constant dense<0.000000e+00> : vector<8x128xf32>
      %40 = vector.multi_reduction <add>, %39, %cst_17 [0] : vector<1x8x128xf32> to vector<8x128xf32>
      %41 = arith.addf %37, %40 : vector<8x128xf32>
      %c0_18 = arith.constant 0 : index
      %c0_19 = arith.constant 0 : index
      %c0_20 = arith.constant 0 : index
      %42 = vector.load %arg5[%c0_18, %c0_19, %c0_20] : memref<1x8x128xf32, #tpu.memory_space<vmem>>, vector<1x8x128xf32>
      %43 = vector.shape_cast %42 : vector<1x8x128xf32> to vector<8x128xf32>
      %44 = vector.shape_cast %41 : vector<8x128xf32> to vector<1x8x128xf32>
      tpu.vector_store %arg5[%c0_18, %c0_19, %c0_20], %44 {strides = array<i32>} : memref<1x8x128xf32, #tpu.memory_space<vmem>>, vector<1x8x128xf32>,
      %c0_21 = arith.constant 0 : index
      %c0_22 = arith.constant 0 : index
      %c0_23 = arith.constant 0 : index
      %45 = vector.load %arg6[%c0_21, %c0_22, %c0_23] : memref<1x8x128xf32, #tpu.memory_space<vmem>>, vector<1x8x128xf32>
      %46 = vector.shape_cast %45 : vector<1x8x128xf32> to vector<8x128xf32>
      %47 = arith.mulf %35, %28 : vector<8x128xf32>
      %48 = vector.shape_cast %47 : vector<8x128xf32> to vector<1x8x128xf32>
      %cst_24 = arith.constant dense<0.000000e+00> : vector<8x128xf32>
      %49 = vector.multi_reduction <add>, %48, %cst_24 [0] : vector<1x8x128xf32> to vector<8x128xf32>
      %50 = arith.addf %46, %49 : vector<8x128xf32>
      %c0_25 = arith.constant 0 : index
      %c0_26 = arith.constant 0 : index
      %c0_27 = arith.constant 0 : index
      %51 = vector.load %arg6[%c0_25, %c0_26, %c0_27] : memref<1x8x128xf32, #tpu.memory_space<vmem>>, vector<1x8x128xf32>
      %52 = vector.shape_cast %51 : vector<1x8x128xf32> to vector<8x128xf32>
      %53 = vector.shape_cast %50 : vector<8x128xf32> to vector<1x8x128xf32>
      tpu.vector_store %arg6[%c0_25, %c0_26, %c0_27], %53 {strides = array<i32>} : memref<1x8x128xf32, #tpu.memory_space<vmem>>, vector<1x8x128xf32>,
      %c0_28 = arith.constant 0 : index
      %c0_29 = arith.constant 0 : index
      %c0_30 = arith.constant 0 : index
      %54 = vector.load %arg7[%c0_28, %c0_29, %c0_30] : memref<1x8x128xf32, #tpu.memory_space<vmem>>, vector<1x8x128xf32>
      %55 = vector.shape_cast %54 : vector<1x8x128xf32> to vector<8x128xf32>
      %56 = arith.mulf %24, %24 : vector<8x128xf32>
      %57 = vector.shape_cast %56 : vector<8x128xf32> to vector<1x8x128xf32>
      %cst_31 = arith.constant dense<0.000000e+00> : vector<8x128xf32>
      %58 = vector.multi_reduction <add>, %57, %cst_31 [0] : vector<1x8x128xf32> to vector<8x128xf32>
      %59 = arith.addf %55, %58 : vector<8x128xf32>
      %c0_32 = arith.constant 0 : index
      %c0_33 = arith.constant 0 : index
      %c0_34 = arith.constant 0 : index
      %60 = vector.load %arg7[%c0_32, %c0_33, %c0_34] : memref<1x8x128xf32, #tpu.memory_space<vmem>>, vector<1x8x128xf32>
      %61 = vector.shape_cast %60 : vector<1x8x128xf32> to vector<8x128xf32>
      %62 = vector.shape_cast %59 : vector<8x128xf32> to vector<1x8x128xf32>
      tpu.vector_store %arg7[%c0_32, %c0_33, %c0_34], %62 {strides = array<i32>} : memref<1x8x128xf32, #tpu.memory_space<vmem>>, vector<1x8x128xf32>,
    } else {
    }
    return
  }
  func.func @transform_0(%arg0: i32, %arg1: i32) -> (i32, i32) {
    %c1_i32 = arith.constant 1 : i32
    %0 = arith.muli %arg0, %c1_i32 : i32
    %1 = arith.addi %0, %arg1 : i32
    %c0_i32 = arith.constant 0 : i32
    %2 = arith.minsi %1, %c0_i32 : i32
    %c0_i32_0 = arith.constant 0 : i32
    %c0_i32_1 = arith.constant 0 : i32
    return %2, %c0_i32_0 : i32, i32
  }
  func.func @transform_1(%arg0: i32, %arg1: i32) -> (i32, i32) {
    %c1_i32 = arith.constant 1 : i32
    %0 = arith.muli %arg0, %c1_i32 : i32
    %1 = arith.addi %0, %arg1 : i32
    %c0_i32 = arith.constant 0 : i32
    %2 = arith.minsi %1, %c0_i32 : i32
    %c0_i32_0 = arith.constant 0 : i32
    %c0_i32_1 = arith.constant 0 : i32
    return %2, %c0_i32_0 : i32, i32
  }
  func.func @transform_2(%arg0: i32, %arg1: i32) -> (i32, i32) {
    %c1_i32 = arith.constant 1 : i32
    %0 = arith.muli %arg0, %c1_i32 : i32
    %1 = arith.addi %0, %arg1 : i32
    %c0_i32 = arith.constant 0 : i32
    %2 = arith.minsi %1, %c0_i32 : i32
    %c0_i32_0 = arith.constant 0 : i32
    %c0_i32_1 = arith.constant 0 : i32
    return %2, %c0_i32_0 : i32, i32
  }
  func.func @transform_3(%arg0: i32, %arg1: i32) -> (i32, i32, i32) {
    %c0_i32 = arith.constant 0 : i32
    %c0_i32_0 = arith.constant 0 : i32
    %c0_i32_1 = arith.constant 0 : i32
    return %arg0, %c0_i32, %c0_i32_0 : i32, i32, i32
  }
  func.func @transform_4(%arg0: i32, %arg1: i32) -> (i32, i32, i32) {
    %c0_i32 = arith.constant 0 : i32
    %c0_i32_0 = arith.constant 0 : i32
    %c0_i32_1 = arith.constant 0 : i32
    return %arg0, %c0_i32, %c0_i32_0 : i32, i32, i32
  }
  func.func @transform_5(%arg0: i32, %arg1: i32) -> (i32, i32, i32) {
    %c0_i32 = arith.constant 0 : i32
    %c0_i32_0 = arith.constant 0 : i32
    %c0_i32_1 = arith.constant 0 : i32
    return %arg0, %c0_i32, %c0_i32_0 : i32, i32, i32
  }
}

</mosaic_0001>

<llo_original>
// kernel: tpu_custom_call.1
$region0: #{tpu_custom_call.1}
  #allocation0 [shape = 'u32[]', space=smem, size = 0x4, offset = 0x4, fixed_abs, tag = 'smem constant byte address 0x4 - core index']
  #allocation1 [shape = 'u32[144,128]{1,0:T(1,128)}', space=vmem, size = 0x12000, scoped, tag = 'internal scratch']
  %s0 = inlined_call_operand.hbm [shape: f32[8,128], index: 0, kind: input, shape index: {}]
  %s1 = inlined_call_operand.hbm [shape: f32[8,128], index: 1, kind: input, shape index: {}]
  %s2 = inlined_call_operand.hbm [shape: f32[8,128], index: 2, kind: input, shape index: {}]
  %s3 = inlined_call_operand.hbm [shape: f32[2,8,128], index: 3, kind: output, shape index: {0}]
  %s4 = inlined_call_operand.hbm [shape: f32[2,8,128], index: 4, kind: output, shape index: {1}]
  %s5 = inlined_call_operand.hbm [shape: f32[2,8,128], index: 5, kind: output, shape index: {2}]
  %6 = xla_tuple %s3, %s4, %s5
  %s7 = sld [smem:[#allocation0]]
  $region85: #{tpu_custom_call.1} parent=0
    _
  %s9 = ssub.s32 1, %s7
  %s10 = scalar_select 0, %s9, %s7
  $region1: #{tpu_custom_call.1} parent=0
    #allocation2 [shape = 'u8[8192]{0}', space=vmem, size = 0x2000, scoped, tag = 'input window, operand 0']
    #allocation3 [shape = 's32[2]{0}', space=sflag, size = 0x8, scoped, tag = 'scoped memory for tpu_custom_call.1']
    #allocation4 [shape = 's32[2]{0}', space=sflag, size = 0x8, scoped, tag = 'scoped memory for tpu_custom_call.1']
    #allocation5 [shape = 'u8[8192]{0}', space=vmem, size = 0x2000, scoped, tag = 'input window, operand 1']
    #allocation6 [shape = 's32[2]{0}', space=sflag, size = 0x8, scoped, tag = 'scoped memory for tpu_custom_call.1']
    #allocation7 [shape = 'u8[8192]{0}', space=vmem, size = 0x2000, scoped, tag = 'input window, operand 2']
    #allocation8 [shape = 'u8[8192]{0}', space=vmem, size = 0x2000, scoped, tag = 'output window, operand 0']
    #allocation9 [shape = 'u8[8192]{0}', space=vmem, size = 0x2000, scoped, tag = 'output window, operand 1']
    #allocation10 [shape = 's32[2]{0}', space=sflag, size = 0x8, scoped, tag = 'scoped memory for tpu_custom_call.1']
    #allocation11 [shape = 'u8[8192]{0}', space=vmem, size = 0x2000, scoped, tag = 'output window, operand 2']
    %11 = vsyncpa [#allocation3], 0
    %s12 = scalar_lea.sflag [#allocation3], 1
    %13 = vsyncpa %s12, 0
    %14 = vsyncpa [#allocation6], 0
    %s15 = scalar_lea.sflag [#allocation6], 1
    %16 = vsyncpa %s15, 0
    %17 = vsyncpa [#allocation4], 0
    %s18 = scalar_lea.sflag [#allocation4], 1
    %19 = vsyncpa %s18, 0
    %20 = vsyncpa [#allocation10], 0
    %s21 = scalar_lea.sflag [#allocation10], 1
    %22 = vsyncpa %s21, 0
    loop: start=0, step=1, limit=4
    $region2: #{tpu_custom_call.1} parent=1 // loop_pre_header
      _
    $region3: #{tpu_custom_call.1} parent=1 // loop_header
      %s24 = sphi 0, %s28
      %p25 = scmp.ge.s32.totalorder %s24, 4
      %s31 = sphi 0, %s43
      %s32 = sphi 0, %s39
      %s33 = sphi 0, %s31
      %s34 = sphi 0, %s32
      %s35 = sphi 0, %s33
      %s36 = sphi 0, %s34
      %s52 = sphi 0, %s54
      %s55 = sphi 0, %s52
      %s56 = sphi 0, %s55
      %s72 = sphi 0, %s56
      %s84 = sphi 0, %s86
      %s87 = sphi 0, %s84
      %s88 = sphi 0, %s87
      %s104 = sphi 0, %s88
      %s116 = sphi 0, %s118
      %s119 = sphi 0, %s116
      %s120 = sphi 0, %s119
      %s136 = sphi 0, %s120
      %s142 = sphi 0, %s144
      %s145 = sphi 0, %s142
      %s146 = sphi 0, %s145
      %s162 = sphi 0, %s146
      %s168 = sphi 0, %s170
      %s171 = sphi 0, %s168
      %s172 = sphi 0, %s171
      %s188 = sphi 0, %s172
      %s194 = sphi 0, %s196
      %s197 = sphi 0, %s194
      %s198 = sphi 0, %s197
      %s214 = sphi 0, %s198
    $region4: #{tpu_custom_call.1} parent=1 // loop_header_branch
      %27 = sbr.rel (%p25) target = $region8
    $region5: #{tpu_custom_call.1} parent=1 // loop_body
      %s29 = ssub.s32 %s24, 1
      %s30 = ssub.s32 %s24, 2
      %s37 = sadd.s32 1, %s32
      %p38 = scmp.ge.s32.totalorder %s37, 1
      %s39 = scalar_select %p38, 0, %s37
      %s40 = sadd.s32 1, %s31
      %s41 = scalar_select %p38, %s40, %s31
      %p42 = scmp.ge.s32.totalorder %s41, 2
      %s43 = scalar_select %p42, 0, %s41
      %s44 = sadd.s32 %s31, %s32
      %p45 = scmp.lt.s32.totalorder %s44, 0
      %s46 = scalar_select %p45, %s44, 0
      %s47 = sadd.s32 %s43, %s39
      %p48 = scmp.lt.s32.totalorder %s47, 0
      %s49 = scalar_select %p48, %s47, 0
      %s50 = ssub.s32 %s46, %s49
      %p51 = scmp.eq.s32.totalorder %s50, 0
      %s53 = sadd.s32 %s52, 1
      %s54 = scalar_select %p51, %s52, %s53
      %p57 = pneg %p51
      %p58 = scmp.eq.s32.totalorder %s24, 1
      %p59 = por %p57, %p58
      %p60 = scmp.ne.s32.totalorder %s52, %s55
      %p61 = scmp.eq.s32.totalorder %s24, 0
      %p62 = por %p60, %p61
      %p63 = scmp.ne.s32.totalorder %s52, %s55
      %p64 = scmp.eq.s32.totalorder %s29, 1
      %p65 = por %p63, %p64
      %p66 = scmp.ne.s32.totalorder %s55, %s56
      %p67 = scmp.eq.s32.totalorder %s29, 0
      %p68 = por %p66, %p67
      %p69 = scmp.ne.s32.totalorder %s55, %s56
      %p70 = scmp.eq.s32.totalorder %s30, 1
      %p71 = por %p69, %p70
      %p73 = scmp.ne.s32.totalorder %s56, %s72
      %p74 = scmp.eq.s32.totalorder %s30, 0
      %p75 = por %p73, %p74
      %s76 = sadd.s32 %s31, %s32
      %p77 = scmp.lt.s32.totalorder %s76, 0
      %s78 = scalar_select %p77, %s76, 0
      %s79 = sadd.s32 %s43, %s39
      %p80 = scmp.lt.s32.totalorder %s79, 0
      %s81 = scalar_select %p80, %s79, 0
      %s82 = ssub.s32 %s78, %s81
      %p83 = scmp.eq.s32.totalorder %s82, 0
      %s85 = sadd.s32 %s84, 1
      %s86 = scalar_select %p83, %s84, %s85
      %p89 = pneg %p83
      %p90 = scmp.eq.s32.totalorder %s24, 1
      %p91 = por %p89, %p90
      %p92 = scmp.ne.s32.totalorder %s84, %s87
      %p93 = scmp.eq.s32.totalorder %s24, 0
      %p94 = por %p92, %p93
      %p95 = scmp.ne.s32.totalorder %s84, %s87
      %p96 = scmp.eq.s32.totalorder %s29, 1
      %p97 = por %p95, %p96
      %p98 = scmp.ne.s32.totalorder %s87, %s88
      %p99 = scmp.eq.s32.totalorder %s29, 0
      %p100 = por %p98, %p99
      %p101 = scmp.ne.s32.totalorder %s87, %s88
      %p102 = scmp.eq.s32.totalorder %s30, 1
      %p103 = por %p101, %p102
      %p105 = scmp.ne.s32.totalorder %s88, %s104
      %p106 = scmp.eq.s32.totalorder %s30, 0
      %p107 = por %p105, %p106
      %s108 = sadd.s32 %s31, %s32
      %p109 = scmp.lt.s32.totalorder %s108, 0
      %s110 = scalar_select %p109, %s108, 0
      %s111 = sadd.s32 %s43, %s39
      %p112 = scmp.lt.s32.totalorder %s111, 0
      %s113 = scalar_select %p112, %s111, 0
      %s114 = ssub.s32 %s110, %s113
      %p115 = scmp.eq.s32.totalorder %s114, 0
      %s117 = sadd.s32 %s116, 1
      %s118 = scalar_select %p115, %s116, %s117
      %p121 = pneg %p115
      %p122 = scmp.eq.s32.totalorder %s24, 1
      %p123 = por %p121, %p122
      %p124 = scmp.ne.s32.totalorder %s116, %s119
      %p125 = scmp.eq.s32.totalorder %s24, 0
      %p126 = por %p124, %p125
      %p127 = scmp.ne.s32.totalorder %s116, %s119
      %p128 = scmp.eq.s32.totalorder %s29, 1
      %p129 = por %p127, %p128
      %p130 = scmp.ne.s32.totalorder %s119, %s120
      %p131 = scmp.eq.s32.totalorder %s29, 0
      %p132 = por %p130, %p131
      %p133 = scmp.ne.s32.totalorder %s119, %s120
      %p134 = scmp.eq.s32.totalorder %s30, 1
      %p135 = por %p133, %p134
      %p137 = scmp.ne.s32.totalorder %s120, %s136
      %p138 = scmp.eq.s32.totalorder %s30, 0
      %p139 = por %p137, %p138
      %s140 = ssub.s32 %s31, %s43
      %p141 = scmp.eq.s32.totalorder %s140, 0
      %s143 = sadd.s32 %s142, 1
      %s144 = scalar_select %p141, %s142, %s143
      %p147 = pneg %p141
      %p148 = scmp.eq.s32.totalorder %s24, 1
      %p149 = por %p147, %p148
      %p150 = scmp.ne.s32.totalorder %s142, %s145
      %p151 = scmp.eq.s32.totalorder %s24, 0
      %p152 = por %p150, %p151
      %p153 = scmp.ne.s32.totalorder %s142, %s145
      %p154 = scmp.eq.s32.totalorder %s29, 1
      %p155 = por %p153, %p154
      %p156 = scmp.ne.s32.totalorder %s145, %s146
      %p157 = scmp.eq.s32.totalorder %s29, 0
      %p158 = por %p156, %p157
      %p159 = scmp.ne.s32.totalorder %s145, %s146
      %p160 = scmp.eq.s32.totalorder %s30, 1
      %p161 = por %p159, %p160
      %p163 = scmp.ne.s32.totalorder %s146, %s162
      %p164 = scmp.eq.s32.totalorder %s30, 0
      %p165 = por %p163, %p164
      %s166 = ssub.s32 %s31, %s43
      %p167 = scmp.eq.s32.totalorder %s166, 0
      %s169 = sadd.s32 %s168, 1
      %s170 = scalar_select %p167, %s168, %s169
      %p173 = pneg %p167
      %p174 = scmp.eq.s32.totalorder %s24, 1
      %p175 = por %p173, %p174
      %p176 = scmp.ne.s32.totalorder %s168, %s171
      %p177 = scmp.eq.s32.totalorder %s24, 0
      %p178 = por %p176, %p177
      %p179 = scmp.ne.s32.totalorder %s168, %s171
      %p180 = scmp.eq.s32.totalorder %s29, 1
      %p181 = por %p179, %p180
      %p182 = scmp.ne.s32.totalorder %s171, %s172
      %p183 = scmp.eq.s32.totalorder %s29, 0
      %p184 = por %p182, %p183
      %p185 = scmp.ne.s32.totalorder %s171, %s172
      %p186 = scmp.eq.s32.totalorder %s30, 1
      %p187 = por %p185, %p186
      %p189 = scmp.ne.s32.totalorder %s172, %s188
      %p190 = scmp.eq.s32.totalorder %s30, 0
      %p191 = por %p189, %p190
      %s192 = ssub.s32 %s31, %s43
      %p193 = scmp.eq.s32.totalorder %s192, 0
      %s195 = sadd.s32 %s194, 1
      %s196 = scalar_select %p193, %s194, %s195
      %p199 = pneg %p193
      %p200 = scmp.eq.s32.totalorder %s24, 1
      %p201 = por %p199, %p200
      %p202 = scmp.ne.s32.totalorder %s194, %s197
      %p203 = scmp.eq.s32.totalorder %s24, 0
      %p204 = por %p202, %p203
      %p205 = scmp.ne.s32.totalorder %s194, %s197
      %p206 = scmp.eq.s32.totalorder %s29, 1
      %p207 = por %p205, %p206
      %p208 = scmp.ne.s32.totalorder %s197, %s198
      %p209 = scmp.eq.s32.totalorder %s29, 0
      %p210 = por %p208, %p209
      %p211 = scmp.ne.s32.totalorder %s197, %s198
      %p212 = scmp.eq.s32.totalorder %s30, 1
      %p213 = por %p211, %p212
      %p215 = scmp.ne.s32.totalorder %s198, %s214
      %p216 = scmp.eq.s32.totalorder %s30, 0
      %p217 = por %p215, %p216
      %p218 = scmp.le.s32.totalorder 1, %s24
      %p219 = scmp.lt.s32.totalorder %s24, 3
      %p220 = pnand %p218, %p219
      %p221 = pneg %p220
      // Predicated region
      $region9: #{tpu_custom_call.1} parent=5 // pred_check
        _
      $region10: #{tpu_custom_call.1} parent=5 // pred_check_branch
        %223 = sbr.rel (%p220) target = $region12
      $region11: #{tpu_custom_call.1} parent=5 // pred_region
        %s224 = ssub.s32 %s24, 1
      $region12: #{tpu_custom_call.1} parent=5 // pred_fallthru
        _
      %p225 = scmp.lt.s32.totalorder %s24, 2
      // Predicated region
      $region13: #{tpu_custom_call.1} parent=5 // pred_check
        %p226 = pneg %p225
      $region14: #{tpu_custom_call.1} parent=5 // pred_check_branch
        %228 = sbr.rel (%p226) target = $region16
      $region15: #{tpu_custom_call.1} parent=5 // pred_region
        // Predicated region
        $region17: #{tpu_custom_call.1} parent=15 // pred_check
          %p229 = pneg %p62
        $region18: #{tpu_custom_call.1} parent=15 // pred_check_branch
          %231 = sbr.rel (%p229) target = $region20
        $region19: #{tpu_custom_call.1} parent=15 // pred_region
          %s232 = sand.u32 %s52, 1
          %s233 = scalar_lea.sflag [#allocation3], %s232
          %s234 = sand.u32 %s52, 1
          %s235 = smul.addr %s234, 8
          %s236 = scalar_lea.vmem [#allocation2], %s235
          %s237 = sadd.s32 %s31, %s32
          %p238 = scmp.lt.s32.totalorder %s237, 0
          %s239 = scalar_select %p238, %s237, 0
          %s241 = ssub.s32 128, 128
          %242 = vsyncadd %s233, %s241
          %s243 = smul.addr %s239, 128
          %s244 = scalar_lea.hbm %s0, %s243
          %s246 = sshll.u32 %s236, 4
          %s247 = int_to_ptr.vmem [resolvable:$true] %s246
          %249 = dma.hbm_to_vmem [thread:$0]  %s244, 128, %s247, %s233
        $region20: #{tpu_custom_call.1} parent=15 // pred_fallthru
          _
        // Predicated region
        $region21: #{tpu_custom_call.1} parent=15 // pred_check
          %p250 = pneg %p94
        $region22: #{tpu_custom_call.1} parent=15 // pred_check_branch
          %252 = sbr.rel (%p250) target = $region24
        $region23: #{tpu_custom_call.1} parent=15 // pred_region
          %s253 = sand.u32 %s24, 1
          %s254 = scalar_lea.sflag [#allocation6], %s253
          %s255 = sand.u32 %s84, 1
          %s256 = smul.addr %s255, 8
          %s257 = scalar_lea.vmem [#allocation5], %s256
          %s258 = sadd.s32 %s31, %s32
          %p259 = scmp.lt.s32.totalorder %s258, 0
          %s260 = scalar_select %p259, %s258, 0
          %s262 = ssub.s32 128, 128
          %263 = vsyncadd %s254, %s262
          %s264 = smul.addr %s260, 128
          %s265 = scalar_lea.hbm %s1, %s264
          %s267 = sshll.u32 %s257, 4
          %s268 = int_to_ptr.vmem [resolvable:$true] %s267
          %270 = dma.hbm_to_vmem [thread:$0]  %s265, 128, %s268, %s254
        $region24: #{tpu_custom_call.1} parent=15 // pred_fallthru
          _
        // Predicated region
        $region25: #{tpu_custom_call.1} parent=15 // pred_check
          %p271 = pneg %p126
        $region26: #{tpu_custom_call.1} parent=15 // pred_check_branch
          %273 = sbr.rel (%p271) target = $region28
        $region27: #{tpu_custom_call.1} parent=15 // pred_region
          %s274 = sand.u32 %s24, 1
          %s275 = scalar_lea.sflag [#allocation6], %s274
          %s276 = sand.u32 %s116, 1
          %s277 = smul.addr %s276, 8
          %s278 = scalar_lea.vmem [#allocation7], %s277
          %s279 = sadd.s32 %s31, %s32
          %p280 = scmp.lt.s32.totalorder %s279, 0
          %s281 = scalar_select %p280, %s279, 0
          %s283 = ssub.s32 128, 128
          %284 = vsyncadd %s275, %s283
          %s285 = smul.addr %s281, 128
          %s286 = scalar_lea.hbm %s2, %s285
          %s288 = sshll.u32 %s278, 4
          %s289 = int_to_ptr.vmem [resolvable:$true] %s288
          %291 = dma.hbm_to_vmem [thread:$0]  %s286, 128, %s289, %s275
        $region28: #{tpu_custom_call.1} parent=15 // pred_fallthru
          _
      $region16: #{tpu_custom_call.1} parent=5 // pred_fallthru
        _
      %p292 = scmp.le.s32.totalorder 1, %s24
      %p293 = scmp.lt.s32.totalorder %s24, 3
      %p294 = pnand %p292, %p293
      %p295 = pneg %p294
      // Predicated region
      $region29: #{tpu_custom_call.1} parent=5 // pred_check
        _
      $region30: #{tpu_custom_call.1} parent=5 // pred_check_branch
        %297 = sbr.rel (%p294) target = $region32
      $region31: #{tpu_custom_call.1} parent=5 // pred_region
        %s298 = ssub.s32 %s24, 1
        %s299 = sand.u32 %s55, 1
        %s300 = scalar_lea.sflag [#allocation3], %s299
        %s301 = sand.u32 %s55, 1
        %s302 = smul.addr %s301, 8
        %s303 = scalar_lea.vmem [#allocation2], %s302
        // Predicated region
        $region33: #{tpu_custom_call.1} parent=31 // pred_check
          %p304 = pneg %p68
        $region34: #{tpu_custom_call.1} parent=31 // pred_check_branch
          %306 = sbr.rel (%p304) target = $region36
        $region35: #{tpu_custom_call.1} parent=31 // pred_region
          %307 = dma.done %s300, 128
        $region36: #{tpu_custom_call.1} parent=31 // pred_fallthru
          _
        %s308 = sand.u32 %s29, 1
        %s309 = scalar_lea.sflag [#allocation6], %s308
        %s310 = sand.u32 %s87, 1
        %s311 = smul.addr %s310, 8
        %s312 = scalar_lea.vmem [#allocation5], %s311
        // Predicated region
        $region37: #{tpu_custom_call.1} parent=31 // pred_check
          %p313 = pneg %p100
        $region38: #{tpu_custom_call.1} parent=31 // pred_check_branch
          %315 = sbr.rel (%p313) target = $region40
        $region39: #{tpu_custom_call.1} parent=31 // pred_region
          %316 = dma.done %s309, 128
        $region40: #{tpu_custom_call.1} parent=31 // pred_fallthru
          _
        %s317 = sand.u32 %s29, 1
        %s318 = scalar_lea.sflag [#allocation6], %s317
        %s319 = sand.u32 %s119, 1
        %s320 = smul.addr %s319, 8
        %s321 = scalar_lea.vmem [#allocation7], %s320
        // Predicated region
        $region41: #{tpu_custom_call.1} parent=31 // pred_check
          %p322 = pneg %p132
        $region42: #{tpu_custom_call.1} parent=31 // pred_check_branch
          %324 = sbr.rel (%p322) target = $region44
        $region43: #{tpu_custom_call.1} parent=31 // pred_region
          %325 = dma.done %s318, 128
        $region44: #{tpu_custom_call.1} parent=31 // pred_fallthru
          _
        %s326 = sand.u32 %s55, 1
        %s327 = scalar_lea.sflag [#allocation3], %s326
        %s328 = sand.u32 %s55, 1
        %s329 = smul.addr %s328, 8
        %s330 = scalar_lea.vmem [#allocation2], %s329
        %p331 = pneg %p68
        %p332 = pneg %p65
        %s333 = sand.u32 %s29, 1
        %s334 = scalar_lea.sflag [#allocation6], %s333
        %s335 = sand.u32 %s87, 1
        %s336 = smul.addr %s335, 8
        %s337 = scalar_lea.vmem [#allocation5], %s336
        %p338 = pneg %p100
        %p339 = pneg %p97
        %s340 = sand.u32 %s29, 1
        %s341 = scalar_lea.sflag [#allocation6], %s340
        %s342 = sand.u32 %s119, 1
        %s343 = smul.addr %s342, 8
        %s344 = scalar_lea.vmem [#allocation7], %s343
        %p345 = pneg %p132
        %p346 = pneg %p129
        %p347 = pneg %p158
        %p348 = pneg %p155
        %s349 = sand.u32 %s145, 1
        %s350 = scalar_lea.sflag [#allocation4], %s349
        %s351 = sand.u32 %s145, 1
        %s352 = smul.addr %s351, 8
        %s353 = scalar_lea.vmem [#allocation8], %s352
        %p354 = pneg %p184
        %p355 = pneg %p181
        %s356 = sand.u32 %s29, 1
        %s357 = scalar_lea.sflag [#allocation10], %s356
        %s358 = sand.u32 %s171, 1
        %s359 = smul.addr %s358, 8
        %s360 = scalar_lea.vmem [#allocation9], %s359
        %p361 = pneg %p210
        %p362 = pneg %p207
        %s363 = sand.u32 %s29, 1
        %s364 = scalar_lea.sflag [#allocation10], %s363
        %s365 = sand.u32 %s197, 1
        %s366 = smul.addr %s365, 8
        %s367 = scalar_lea.vmem [#allocation11], %s366
        %s368 = sadd.s32 %s33, %s34
        %p369 = scmp.lt.s32.totalorder %s368, 0
        %s370 = scalar_select %p369, %s368, 0
        %s371 = sadd.s32 %s33, %s34
        %p372 = scmp.lt.s32.totalorder %s371, 0
        %s373 = scalar_select %p372, %s371, 0
        %s374 = sadd.s32 %s33, %s34
        %p375 = scmp.lt.s32.totalorder %s374, 0
        %s376 = scalar_select %p375, %s374, 0
        %p377 = scmp.eq.s32.totalorder %s34, 0
        // Predicated region
        $region45: #{tpu_custom_call.1} parent=31 // pred_check
          %p378 = pneg %p377
        $region46: #{tpu_custom_call.1} parent=31 // pred_check_branch
          %380 = sbr.rel (%p378) target = $region48
        $region47: #{tpu_custom_call.1} parent=31 // pred_region
          %381 = vst [vmem:[%s353] sm:$0xff] 0.0
          %382 = vst [vmem:[%s360] sm:$0xff] 0.0
          %383 = vst [vmem:[%s367] sm:$0xff] 0.0
        $region48: #{tpu_custom_call.1} parent=31 // pred_fallthru
          _
        %s384 = sadd.s32 %s33, %s34
        %s385 = smul.u32 %s384, 1024
        %s386 = ssub.s32 32, %s385
        %p387 = scmp.lt.s32.totalorder %s386, 1024
        %p388 = scmp.ge.s32.totalorder %s386, 1024
        // Predicated region
        $region49: #{tpu_custom_call.1} parent=31 // pred_check
          %p389 = pneg %p388
        $region50: #{tpu_custom_call.1} parent=31 // pred_check_branch
          %391 = sbr.rel (%p389) target = $region52
        $region51: #{tpu_custom_call.1} parent=31 // pred_region
          %v392 = vld [vmem:[%s303] sm:$0xff]
          %v393 = vld [vmem:[%s312] sm:$0xff]
          %v394 = vld [vmem:[%s321] sm:$0xff]
          %v395 = vmul.f32 %v392, 0.5
          %v396 = vtanh.pop %v395
          %v397 = vadd.f32 %v396, 1.0
          %v398 = vmul.f32 %v397, 0.5
          %v399 = vld [vmem:[%s353] sm:$0xff]
          %v400 = vmul.f32 %v398, %v393
          %v401 = vadd.f32 %v400, 0.0
          %v402 = vadd.f32 %v399, %v401
          %403 = vst [vmem:[%s353] sm:$0xff] %v402
          %v404 = vld [vmem:[%s360] sm:$0xff]
          %v405 = vmul.f32 %v398, %v394
          %v406 = vadd.f32 %v405, 0.0
          %v407 = vadd.f32 %v404, %v406
          %408 = vst [vmem:[%s360] sm:$0xff] %v407
          %v409 = vld [vmem:[%s367] sm:$0xff]
          %v410 = vmul.f32 %v392, %v392
          %v411 = vadd.f32 %v410, 0.0
          %v412 = vadd.f32 %v409, %v411
          %413 = vst [vmem:[%s367] sm:$0xff] %v412
        $region52: #{tpu_custom_call.1} parent=31 // pred_fallthru
          _
        // Predicated region
        $region53: #{tpu_custom_call.1} parent=31 // pred_check
          %p414 = pneg %p387
        $region54: #{tpu_custom_call.1} parent=31 // pred_check_branch
          %416 = sbr.rel (%p414) target = $region56
        $region55: #{tpu_custom_call.1} parent=31 // pred_region
          %v417 = vld [vmem:[%s303] sm:$0xff]
          %v418 = vld [vmem:[%s312] sm:$0xff]
          %v419 = vld [vmem:[%s321] sm:$0xff]
          %v420 = vlaneseq
          %v421 = vshrl.u32 %v420, 7
          %v422 = vlaneseq
          %v423 = vand.u32 %v422, 127
          %v424 = vmul.u32 %v421, 128
          %v425 = vadd.s32 %v424, %v423
          %v426 = vstv %s386
          %vm427 = vcmp.lt.s32.totalorder %v425, %v426
          %v428 = vsel %vm427, %v417, 0.0
          %v429 = vsel %vm427, %v418, 0.0
          %v430 = vsel %vm427, %v419, 0.0
          %v431 = vmul.f32 %v428, 0.5
          %v432 = vtanh.pop %v431
          %v433 = vadd.f32 %v432, 1.0
          %v434 = vmul.f32 %v433, 0.5
          %v435 = vld [vmem:[%s353] sm:$0xff]
          %v436 = vmul.f32 %v434, %v429
          %v437 = vadd.f32 %v436, 0.0
          %v438 = vadd.f32 %v435, %v437
          %439 = vst [vmem:[%s353] sm:$0xff] %v438
          %v440 = vld [vmem:[%s360] sm:$0xff]
          %v441 = vmul.f32 %v434, %v430
          %v442 = vadd.f32 %v441, 0.0
          %v443 = vadd.f32 %v440, %v442
          %444 = vst [vmem:[%s360] sm:$0xff] %v443
          %v445 = vld [vmem:[%s367] sm:$0xff]
          %v446 = vmul.f32 %v428, %v428
          %v447 = vadd.f32 %v446, 0.0
          %v448 = vadd.f32 %v445, %v447
          %449 = vst [vmem:[%s367] sm:$0xff] %v448
        $region56: #{tpu_custom_call.1} parent=31 // pred_fallthru
          _
        %s450 = sand.u32 %s145, 1
        %s451 = scalar_lea.sflag [#allocation4], %s450
        %s452 = sand.u32 %s145, 1
        %s453 = smul.addr %s452, 8
        %s454 = scalar_lea.vmem [#allocation8], %s453
        %s455 = sand.u32 %s29, 1
        %s456 = scalar_lea.sflag [#allocation10], %s455
        %s457 = sand.u32 %s171, 1
        %s458 = smul.addr %s457, 8
        %s459 = scalar_lea.vmem [#allocation9], %s458
        %s460 = sand.u32 %s29, 1
        %s461 = scalar_lea.sflag [#allocation10], %s460
        %s462 = sand.u32 %s197, 1
        %s463 = smul.addr %s462, 8
        %s464 = scalar_lea.vmem [#allocation11], %s463
        // Predicated region
        $region57: #{tpu_custom_call.1} parent=31 // pred_check
          %p465 = pneg %p155
        $region58: #{tpu_custom_call.1} parent=31 // pred_check_branch
          %467 = sbr.rel (%p465) target = $region60
        $region59: #{tpu_custom_call.1} parent=31 // pred_region
          %s469 = ssub.s32 128, 128
          %470 = vsyncadd %s451, %s469
          %s471 = smul.addr %s33, 128
          %s472 = scalar_lea.hbm %s3, %s471
          %s474 = sshll.u32 %s454, 4
          %s475 = int_to_ptr.vmem [resolvable:$true] %s474
          %477 = dma.vmem_to_hbm [thread:$0]  %s475, 128, %s472, %s451
        $region60: #{tpu_custom_call.1} parent=31 // pred_fallthru
          _
        // Predicated region
        $region61: #{tpu_custom_call.1} parent=31 // pred_check
          %p478 = pneg %p181
        $region62: #{tpu_custom_call.1} parent=31 // pred_check_branch
          %480 = sbr.rel (%p478) target = $region64
        $region63: #{tpu_custom_call.1} parent=31 // pred_region
          %s482 = ssub.s32 128, 128
          %483 = vsyncadd %s456, %s482
          %s484 = smul.addr %s33, 128
          %s485 = scalar_lea.hbm %s4, %s484
          %s487 = sshll.u32 %s459, 4
          %s488 = int_to_ptr.vmem [resolvable:$true] %s487
          %490 = dma.vmem_to_hbm [thread:$0]  %s488, 128, %s485, %s456
        $region64: #{tpu_custom_call.1} parent=31 // pred_fallthru
          _
        // Predicated region
        $region65: #{tpu_custom_call.1} parent=31 // pred_check
          %p491 = pneg %p207
        $region66: #{tpu_custom_call.1} parent=31 // pred_check_branch
          %493 = sbr.rel (%p491) target = $region68
        $region67: #{tpu_custom_call.1} parent=31 // pred_region
          %s495 = ssub.s32 128, 128
          %496 = vsyncadd %s461, %s495
          %s497 = smul.addr %s33, 128
          %s498 = scalar_lea.hbm %s5, %s497
          %s500 = sshll.u32 %s464, 4
          %s501 = int_to_ptr.vmem [resolvable:$true] %s500
          %503 = dma.vmem_to_hbm [thread:$0]  %s501, 128, %s498, %s461
        $region68: #{tpu_custom_call.1} parent=31 // pred_fallthru
          _
      $region32: #{tpu_custom_call.1} parent=5 // pred_fallthru
        _
      %p504 = scmp.le.s32.totalorder 2, %s24
      // Predicated region
      $region69: #{tpu_custom_call.1} parent=5 // pred_check
        %p505 = pneg %p504
      $region70: #{tpu_custom_call.1} parent=5 // pred_check_branch
        %507 = sbr.rel (%p505) target = $region72
      $region71: #{tpu_custom_call.1} parent=5 // pred_region
        %s508 = ssub.s32 %s24, 2
        // Predicated region
        $region73: #{tpu_custom_call.1} parent=71 // pred_check
          %p509 = pneg %p161
        $region74: #{tpu_custom_call.1} parent=71 // pred_check_branch
          %511 = sbr.rel (%p509) target = $region76
        $region75: #{tpu_custom_call.1} parent=71 // pred_region
          %s512 = sand.u32 %s146, 1
          %s513 = scalar_lea.sflag [#allocation4], %s512
          %s514 = sand.u32 %s146, 1
          %s515 = smul.addr %s514, 8
          %s516 = scalar_lea.vmem [#allocation8], %s515
          %517 = dma.done %s513, 128
        $region76: #{tpu_custom_call.1} parent=71 // pred_fallthru
          _
        // Predicated region
        $region77: #{tpu_custom_call.1} parent=71 // pred_check
          %p518 = pneg %p187
        $region78: #{tpu_custom_call.1} parent=71 // pred_check_branch
          %520 = sbr.rel (%p518) target = $region80
        $region79: #{tpu_custom_call.1} parent=71 // pred_region
          %s521 = sand.u32 %s30, 1
          %s522 = scalar_lea.sflag [#allocation10], %s521
          %s523 = sand.u32 %s172, 1
          %s524 = smul.addr %s523, 8
          %s525 = scalar_lea.vmem [#allocation9], %s524
          %526 = dma.done %s522, 128
        $region80: #{tpu_custom_call.1} parent=71 // pred_fallthru
          _
        // Predicated region
        $region81: #{tpu_custom_call.1} parent=71 // pred_check
          %p527 = pneg %p213
        $region82: #{tpu_custom_call.1} parent=71 // pred_check_branch
          %529 = sbr.rel (%p527) target = $region84
        $region83: #{tpu_custom_call.1} parent=71 // pred_region
          %s530 = sand.u32 %s30, 1
          %s531 = scalar_lea.sflag [#allocation10], %s530
          %s532 = sand.u32 %s198, 1
          %s533 = smul.addr %s532, 8
          %s534 = scalar_lea.vmem [#allocation11], %s533
          %535 = dma.done %s531, 128
        $region84: #{tpu_custom_call.1} parent=71 // pred_fallthru
          _
      $region72: #{tpu_custom_call.1} parent=5 // pred_fallthru
        _
    $region6: #{tpu_custom_call.1} parent=1 // loop_footer
      %s28 = sadd.s32 1, %s24
    $region7: #{tpu_custom_call.1} parent=1 // loop_footer_branch
      %23 = sbr.rel target = $region3
    $region8: #{tpu_custom_call.1} parent=1 // loop_exit
      _
    %536 = vsyncpa [#allocation3], 1
    %s537 = scalar_lea.sflag [#allocation3], 1
    %538 = vsyncpa %s537, 1
    %539 = vsyncpa [#allocation6], 1
    %s540 = scalar_lea.sflag [#allocation6], 1
    %541 = vsyncpa %s540, 1
    %542 = vsyncpa [#allocation4], 1
    %s543 = scalar_lea.sflag [#allocation4], 1
    %544 = vsyncpa %s543, 1
    %545 = vsyncpa [#allocation10], 1
    %s546 = scalar_lea.sflag [#allocation10], 1
    %547 = vsyncpa %s546, 1

</llo_original>
